<compile_context>
chip_gen: v6e
topology: v6e:2x2x1
jax: 0.10.0
libtpu: 0.0.40
codegen_flags: <defaults>
</compile_context>

<pallas_src>
import functools

import jax
import jax.numpy as jnp
from jax.experimental import pallas as pl
from jax.experimental.pallas import tpu as pltpu

_MIB = 1024 * 1024
_VMEM_BUDGET = 36 * _MIB   # target working set for the main kernel
_VMEM_FLOOR = 24 * _MIB
_VMEM_CAP = 52 * _MIB      # leave headroom below v7x's 64 MiB physical VMEM


def _round_up(x, m):
    return ((x + m - 1) // m) * m


def _cdiv(a, b):
    return -(-a // b)


def _clamp_vmem(est):
    return int(min(max(int(est * 1.4), _VMEM_FLOOR), _VMEM_CAP))


def _vmem_bytes_main(tm, dp, tv, x_isz):
    return (2 * tm * dp * x_isz          # x tile (double buffered, native dtype)
            + 2 * dp * tv * 2            # W tile, bf16
            + 2 * 8 * tv * 4             # bias tile (sublane padded)
            + 2 * tm * tv * 4            # f32 logits output tile
            + 4 * tm * 128 * 4           # lse output + m/l scratch (lane padded)
            + tm * tv * 4 + tm * dp * 2) # in-kernel temporaries headroom


def _vmem_bytes_fixup(tm, tv, out_isz):
    return (2 * tm * 128 * 4             # lse tile
            + 2 * tm * tv * 4            # f32 logits tile
            + 2 * tm * tv * out_isz      # output tile
            + tm * tv * 4)               # temporaries headroom


# ---------------------------------------------------------------------------
# Kernel 1: logits tiles + streaming log-sum-exp (online softmax statistics)
# ---------------------------------------------------------------------------
def _logits_lse_kernel(x_ref, w_ref, b_ref, logits_ref, lse_ref, m_sc, l_sc):
    # grid = (row_tiles, vocab_tiles); vocab axis (reduction for lse) is last.
    # x_ref:  (tm, D_pad)  native dtype (cast to bf16 in-kernel for the MXU)
    # w_ref:  (D_pad, tv)  bf16         b_ref: (1, tv) f32
    # logits_ref: (tm, tv) f32          lse_ref: (tm, 1) f32
    j = pl.program_id(1)

    logits = jnp.dot(
        x_ref[...].astype(jnp.bfloat16), w_ref[...],
        preferred_element_type=jnp.float32,
    ) + b_ref[...]                                            # (tm, tv) f32
    logits_ref[...] = logits

    @pl.when(j == 0)
    def _():
        m_sc[...] = jnp.full(m_sc.shape, -jnp.inf, jnp.float32)
        l_sc[...] = jnp.zeros(l_sc.shape, jnp.float32)

    # Online log-sum-exp accumulation across vocab tiles.
    m_prev = m_sc[...]
    m_new = jnp.maximum(m_prev, jnp.max(logits, axis=-1, keepdims=True))
    l_sc[...] = (l_sc[...] * jnp.exp(m_prev - m_new)
                 + jnp.sum(jnp.exp(logits - m_new), axis=-1, keepdims=True))
    m_sc[...] = m_new

    @pl.when(j == pl.num_programs(1) - 1)
    def _():
        lse_ref[...] = m_sc[...] + jnp.log(l_sc[...])


# ---------------------------------------------------------------------------
# Kernel 2: elementwise normalization  out = logits - lse  (no matmul recompute)
# ---------------------------------------------------------------------------
def _normalize_kernel(lse_ref, logits_ref, o_ref):
    o_ref[...] = (logits_ref[...] - lse_ref[...]).astype(o_ref.dtype)


# ---------------------------------------------------------------------------
# Parameter prep (do ONCE at model init): pad + cast W/b, pick vocab tile.
# ---------------------------------------------------------------------------
def prepare_generator_params(w, b, *, tv=1024):
    """w: [D, V], b: [V] -> (w_prepared [D_pad, V_pad] bf16,
                             b_prepared [1, V_pad] f32, tv_eff).

    Padded vocab columns get a -1e30 bias so they never affect the softmax
    normalizer; D is padded to a multiple of 128 (lane-aligned contraction).
    """
    D, V = w.shape
    tv_eff = min(tv, _round_up(V, 128))
    D_pad = _round_up(D, 128)
    V_pad = _round_up(V, tv_eff)
    w_p = jnp.pad(w, ((0, D_pad - D), (0, V_pad - V))).astype(jnp.bfloat16)
    b_p = jnp.pad(b.astype(jnp.float32).reshape(1, V),
                  ((0, 0), (0, V_pad - V)), constant_values=-1e30)
    return w_p, b_p, tv_eff


# ---------------------------------------------------------------------------
# Forward with prepared params
# ---------------------------------------------------------------------------
@functools.partial(jax.jit, static_argnames=("vocab", "tv", "tm", "out_dtype"))
def generator_forward_prepared(x, w_p, b_p, *, vocab, tv, tm=1024,
                               out_dtype=None):
    """x: [B, S, D] -> log-probs [B, S, vocab].

    w_p/b_p/tv come from prepare_generator_params.  Pass
    out_dtype=jnp.bfloat16 to halve the M*V writeback for large vocabularies.
    """
    B, S, D = x.shape
    D_pad, V_pad = w_p.shape
    assert V_pad % tv == 0 and D_pad % 128 == 0 and D <= D_pad
    M = B * S
    out_dtype = x.dtype if out_dtype is None else out_dtype

    # ---- row tile sizing ---------------------------------------------------
    tm_eff = max(16, min(tm, _round_up(M, 16)))
    # Ensure >= 2 row tiles for big M so both v7x TensorCores get work, while
    # keeping >= 512 rows/tile so single-TC chips keep W-stream intensity.
    if M >= 1024 and _cdiv(M, tm_eff) == 1:
        tm_eff = _round_up(_cdiv(M, 2), 16)
    x_isz = jnp.dtype(x.dtype).itemsize
    while (_vmem_bytes_main(tm_eff, D_pad, tv, x_isz) > _VMEM_BUDGET
           and tm_eff > 128):
        tm_eff = max(128, _round_up(tm_eff // 2, 16))

    M_pad = _round_up(M, tm_eff)
    x2 = x.reshape(M, D)
    if M_pad != M or D_pad != D:
        x2 = jnp.pad(x2, ((0, M_pad - M), (0, D_pad - D)))

    n_row = M_pad // tm_eff
    n_voc = V_pad // tv
    vmem1 = _clamp_vmem(_vmem_bytes_main(tm_eff, D_pad, tv, x_isz))
    out_isz = jnp.dtype(out_dtype).itemsize
    vmem2 = _clamp_vmem(_vmem_bytes_fixup(tm_eff, tv, out_isz))

    # ---- kernel 1: logits + per-row lse -------------------------------------
    logits_pad, lse = pl.pallas_call(
        _logits_lse_kernel,
        out_shape=(jax.ShapeDtypeStruct((M_pad, V_pad), jnp.float32),
                   jax.ShapeDtypeStruct((M_pad, 1), jnp.float32)),
        grid_spec=pltpu.PrefetchScalarGridSpec(
            num_scalar_prefetch=0,
            grid=(n_row, n_voc),
            in_specs=[
                # x row tile: resident across the vocab axis (one HBM read).
                pl.BlockSpec((tm_eff, D_pad), lambda i, j: (i, 0)),
                # W vocab tile: streamed along j, exactly once per row tile.
                pl.BlockSpec((D_pad, tv), lambda i, j: (0, j)),
                pl.BlockSpec((1, tv), lambda i, j: (0, j)),
            ],
            out_specs=[
                pl.BlockSpec((tm_eff, tv), lambda i, j: (i, j)),
                # lse block resident across j, written once at the last tile.
                pl.BlockSpec((tm_eff, 1), lambda i, j: (i, 0)),
            ],
            scratch_shapes=[pltpu.VMEM((tm_eff, 1), jnp.float32),   # running max
                            pltpu.VMEM((tm_eff, 1), jnp.float32)],  # running sum-exp
        ),
        compiler_params=pltpu.CompilerParams(
            dimension_semantics=("parallel", "arbitrary"),
            vmem_limit_bytes=vmem1,
        ),
    )(x2, w_p, b_p)

    # ---- kernel 2: out = logits - lse ---------------------------------------
    out_pad = pl.pallas_call(
        _normalize_kernel,
        out_shape=jax.ShapeDtypeStruct((M_pad, V_pad), out_dtype),
        grid_spec=pltpu.PrefetchScalarGridSpec(
            num_scalar_prefetch=0,
            grid=(n_row, n_voc),
            in_specs=[
                pl.BlockSpec((tm_eff, 1), lambda i, j: (i, 0)),
                pl.BlockSpec((tm_eff, tv), lambda i, j: (i, j)),
            ],
            out_specs=pl.BlockSpec((tm_eff, tv), lambda i, j: (i, j)),
        ),
        compiler_params=pltpu.CompilerParams(
            dimension_semantics=("parallel", "parallel"),
            vmem_limit_bytes=vmem2,
        ),
    )(lse, logits_pad)

    return out_pad[:M, :vocab].reshape(B, S, vocab)


def generator_forward(x, w, b, *, tm=1024, tv=1024, out_dtype=None):
    """Convenience one-shot path; prefer prepare_generator_params at init."""
    w_p, b_p, tv_eff = prepare_generator_params(w, b, tv=tv)
    return generator_forward_prepared(x, w_p, b_p, vocab=w.shape[1],
                                      tv=tv_eff, tm=tm, out_dtype=out_dtype)


def reference_forward(x, w, b):
    logits = jnp.einsum("bsd,dv->bsv", x, w) + b
    return jax.nn.log_softmax(logits, axis=-1)


if __name__ == "__main__":
    key = jax.random.PRNGKey(0)

    # (B, S, D, V, tm, tv): small shapes implied by the module; the third case
    # forces multiple row tiles and vocab tiles to exercise the streaming LSE
    # and the normalize (fixup) kernel, plus the padding paths.
    cases = [
        (2, 8, 32, 128, 1024, 1024),
        (1, 5, 20, 100, 1024, 1024),
        (2, 48, 40, 300, 32, 128),
    ]
    for (B, S, D, V, tm, tv) in cases:
        kx, kw, kb, key = jax.random.split(key, 4)
        x = jax.random.normal(kx, (B, S, D), dtype=jnp.float32)
        # Deterministic nn.Linear-style params (synthetic, not a checkpoint).
        bound = 1.0 / (D ** 0.5)
        w = jax.random.uniform(kw, (D, V), minval=-bound, maxval=bound,
                               dtype=jnp.float32)
        b = jax.random.uniform(kb, (V,), minval=-bound, maxval=bound,
                               dtype=jnp.float32)

        # Prep once (model init); forward reuses the prepared, bf16-cast W.
        w_p, b_p, tv_eff = prepare_generator_params(w, b, tv=tv)
        out = jax.block_until_ready(
            generator_forward_prepared(x, w_p, b_p, vocab=V, tv=tv_eff, tm=tm))
        ref = reference_forward(x, w, b)

        assert out.shape == (B, S, V)
        # bf16 MXU inputs (f32 accumulation) -> loosened tolerance vs f32 ref.
        assert jnp.allclose(out, ref, atol=2e-2, rtol=2e-2), "mismatch vs reference"
        # log-probabilities must normalize to 1 along the vocab axis.
        assert jnp.allclose(jnp.sum(jnp.exp(out), axis=-1), 1.0, atol=1e-2)

    print("KERNEL_OK")
</pallas_src>

<mosaic_0001>
module attributes {stable_mosaic.version = 11 : i64} {
  func.func @_logits_lse_kernel(%arg0: i32, %arg1: i32, %arg2: memref<16x128xf32, #tpu.memory_space<vmem>>, %arg3: memref<128x128xbf16, #tpu.memory_space<vmem>>, %arg4: memref<1x128xf32, #tpu.memory_space<vmem>>, %arg5: memref<16x128xf32, #tpu.memory_space<vmem>>, %arg6: memref<16x1xf32, #tpu.memory_space<vmem>>, %arg7: memref<16x1xf32, #tpu.memory_space<vmem>>, %arg8: memref<16x1xf32, #tpu.memory_space<vmem>>) attributes {dimension_semantics = [#tpu.dimension_semantics<parallel>, #tpu.dimension_semantics<arbitrary>], iteration_bounds = array<i64: 1, 1>, scalar_prefetch = 0 : i64, scratch_operands = 2 : i64, tpu.core_type = #tpu.core_type<tc>, window_params = [{transform_indices = @transform_0, window_bounds = array<i64: 16, 128>}, {transform_indices = @transform_1, window_bounds = array<i64: 128, 128>}, {transform_indices = @transform_2, window_bounds = array<i64: 1, 128>}, {transform_indices = @transform_3, window_bounds = array<i64: 16, 128>}, {transform_indices = @transform_4, window_bounds = array<i64: 16, 1>}]} {
    %c0 = arith.constant 0 : index
    %c0_0 = arith.constant 0 : index
    %0 = vector.load %arg2[%c0, %c0_0] : memref<16x128xf32, #tpu.memory_space<vmem>>, vector<16x128xf32>
    %1 = arith.truncf %0 : vector<16x128xf32> to vector<16x128xbf16>
    %c0_1 = arith.constant 0 : index
    %c0_2 = arith.constant 0 : index
    %2 = vector.load %arg3[%c0_1, %c0_2] : memref<128x128xbf16, #tpu.memory_space<vmem>>, vector<128x128xbf16>
    %cst = arith.constant dense<0.000000e+00> : vector<16x128xf32>
    %3 = tpu.matmul %1, %2, %cst {dimension_numbers = #tpu.dot_dimension_numbers<[1], [0], [0], [1], [0, 0, 1, 1], [], []>} : vector<16x128xbf16>, vector<128x128xbf16>, vector<16x128xf32> -> vector<16x128xf32>
    %c0_3 = arith.constant 0 : index
    %c0_4 = arith.constant 0 : index
    %4 = vector.load %arg4[%c0_3, %c0_4] : memref<1x128xf32, #tpu.memory_space<vmem>>, vector<1x128xf32>
    %5 = vector.broadcast %4 : vector<1x128xf32> to vector<16x128xf32>
    %6 = arith.addf %3, %5 : vector<16x128xf32>
    %c0_5 = arith.constant 0 : index
    %c0_6 = arith.constant 0 : index
    %7 = vector.load %arg5[%c0_5, %c0_6] : memref<16x128xf32, #tpu.memory_space<vmem>>, vector<16x128xf32>
    tpu.vector_store %arg5[%c0_5, %c0_6], %6 {strides = array<i32>} : memref<16x128xf32, #tpu.memory_space<vmem>>, vector<16x128xf32>,
    %c0_i32 = arith.constant 0 : i32
    %8 = arith.cmpi eq, %arg1, %c0_i32 : i32
    %9 = arith.extui %8 : i1 to i32
    %c0_i32_7 = arith.constant 0 : i32
    %10 = arith.cmpi ne, %9, %c0_i32_7 : i32
    scf.if %10 {
      %cst_20 = arith.constant 0xFF800000 : f32
      %30 = vector.broadcast %cst_20 : f32 to vector<16x1xf32>
      %c0_21 = arith.constant 0 : index
      %c0_22 = arith.constant 0 : index
      %31 = vector.load %arg7[%c0_21, %c0_22] : memref<16x1xf32, #tpu.memory_space<vmem>>, vector<16x1xf32>
      tpu.vector_store %arg7[%c0_21, %c0_22], %30 {strides = array<i32>} : memref<16x1xf32, #tpu.memory_space<vmem>>, vector<16x1xf32>,
      %cst_23 = arith.constant 0.000000e+00 : f32
      %32 = vector.broadcast %cst_23 : f32 to vector<16x1xf32>
      %c0_24 = arith.constant 0 : index
      %c0_25 = arith.constant 0 : index
      %33 = vector.load %arg8[%c0_24, %c0_25] : memref<16x1xf32, #tpu.memory_space<vmem>>, vector<16x1xf32>
      tpu.vector_store %arg8[%c0_24, %c0_25], %32 {strides = array<i32>} : memref<16x1xf32, #tpu.memory_space<vmem>>, vector<16x1xf32>,
    } else {
    }
    %c0_8 = arith.constant 0 : index
    %c0_9 = arith.constant 0 : index
    %11 = vector.load %arg7[%c0_8, %c0_9] : memref<16x1xf32, #tpu.memory_space<vmem>>, vector<16x1xf32>
    %cst_10 = arith.constant dense<0xFF800000> : vector<16xf32>
    %12 = vector.multi_reduction <maximumf>, %6, %cst_10 [1] : vector<16x128xf32> to vector<16xf32>
    %13 = vector.shape_cast %12 : vector<16xf32> to vector<16x1xf32>
    %14 = arith.maximumf %11, %13 : vector<16x1xf32>
    %c0_11 = arith.constant 0 : index
    %c0_12 = arith.constant 0 : index
    %15 = vector.load %arg8[%c0_11, %c0_12] : memref<16x1xf32, #tpu.memory_space<vmem>>, vector<16x1xf32>
    %16 = arith.subf %11, %14 : vector<16x1xf32>
    %17 = math.exp %16 : vector<16x1xf32>
    %18 = arith.mulf %15, %17 : vector<16x1xf32>
    %19 = vector.broadcast %14 : vector<16x1xf32> to vector<16x128xf32>
    %20 = arith.subf %6, %19 : vector<16x128xf32>
    %21 = math.exp %20 : vector<16x128xf32>
    %cst_13 = arith.constant dense<0.000000e+00> : vector<16xf32>
    %22 = vector.multi_reduction <add>, %21, %cst_13 [1] : vector<16x128xf32> to vector<16xf32>
    %23 = vector.shape_cast %22 : vector<16xf32> to vector<16x1xf32>
    %24 = arith.addf %18, %23 : vector<16x1xf32>
    %c0_14 = arith.constant 0 : index
    %c0_15 = arith.constant 0 : index
    %25 = vector.load %arg8[%c0_14, %c0_15] : memref<16x1xf32, #tpu.memory_space<vmem>>, vector<16x1xf32>
    tpu.vector_store %arg8[%c0_14, %c0_15], %24 {strides = array<i32>} : memref<16x1xf32, #tpu.memory_space<vmem>>, vector<16x1xf32>,
    %c0_16 = arith.constant 0 : index
    %c0_17 = arith.constant 0 : index
    %26 = vector.load %arg7[%c0_16, %c0_17] : memref<16x1xf32, #tpu.memory_space<vmem>>, vector<16x1xf32>
    tpu.vector_store %arg7[%c0_16, %c0_17], %14 {strides = array<i32>} : memref<16x1xf32, #tpu.memory_space<vmem>>, vector<16x1xf32>,
    %c0_i32_18 = arith.constant 0 : i32
    %27 = arith.cmpi eq, %arg1, %c0_i32_18 : i32
    %28 = arith.extui %27 : i1 to i32
    %c0_i32_19 = arith.constant 0 : i32
    %29 = arith.cmpi ne, %28, %c0_i32_19 : i32
    scf.if %29 {
      %c0_20 = arith.constant 0 : index
      %c0_21 = arith.constant 0 : index
      %30 = vector.load %arg7[%c0_20, %c0_21] : memref<16x1xf32, #tpu.memory_space<vmem>>, vector<16x1xf32>
      %c0_22 = arith.constant 0 : index
      %c0_23 = arith.constant 0 : index
      %31 = vector.load %arg8[%c0_22, %c0_23] : memref<16x1xf32, #tpu.memory_space<vmem>>, vector<16x1xf32>
      %32 = math.log %31 : vector<16x1xf32>
      %33 = arith.addf %30, %32 : vector<16x1xf32>
      %c0_24 = arith.constant 0 : index
      %c0_25 = arith.constant 0 : index
      %34 = vector.load %arg6[%c0_24, %c0_25] : memref<16x1xf32, #tpu.memory_space<vmem>>, vector<16x1xf32>
      tpu.vector_store %arg6[%c0_24, %c0_25], %33 {strides = array<i32>} : memref<16x1xf32, #tpu.memory_space<vmem>>, vector<16x1xf32>,
    } else {
    }
    return
  }
  func.func @transform_0(%arg0: i32, %arg1: i32) -> (i32, i32) {
    %c0_i32 = arith.constant 0 : i32
    %c0_i32_0 = arith.constant 0 : i32
    return %arg0, %c0_i32 : i32, i32
  }
  func.func @transform_1(%arg0: i32, %arg1: i32) -> (i32, i32) {
    %c0_i32 = arith.constant 0 : i32
    %c0_i32_0 = arith.constant 0 : i32
    return %c0_i32, %arg1 : i32, i32
  }
  func.func @transform_2(%arg0: i32, %arg1: i32) -> (i32, i32) {
    %c0_i32 = arith.constant 0 : i32
    %c0_i32_0 = arith.constant 0 : i32
    return %c0_i32, %arg1 : i32, i32
  }
  func.func @transform_3(%arg0: i32, %arg1: i32) -> (i32, i32) {
    %c0_i32 = arith.constant 0 : i32
    return %arg0, %arg1 : i32, i32
  }
  func.func @transform_4(%arg0: i32, %arg1: i32) -> (i32, i32) {
    %c0_i32 = arith.constant 0 : i32
    %c0_i32_0 = arith.constant 0 : i32
    return %arg0, %c0_i32 : i32, i32
  }
}

module attributes {stable_mosaic.version = 11 : i64} {
  func.func @_normalize_kernel(%arg0: i32, %arg1: i32, %arg2: memref<16x1xf32, #tpu.memory_space<vmem>>, %arg3: memref<16x128xf32, #tpu.memory_space<vmem>>, %arg4: memref<16x128xf32, #tpu.memory_space<vmem>>) attributes {dimension_semantics = [#tpu.dimension_semantics<parallel>, #tpu.dimension_semantics<parallel>], iteration_bounds = array<i64: 1, 1>, scalar_prefetch = 0 : i64, scratch_operands = 0 : i64, tpu.core_type = #tpu.core_type<tc>, window_params = [{transform_indices = @transform_0, window_bounds = array<i64: 16, 1>}, {transform_indices = @transform_1, window_bounds = array<i64: 16, 128>}, {transform_indices = @transform_2, window_bounds = array<i64: 16, 128>}]} {
    %c0 = arith.constant 0 : index
    %c0_0 = arith.constant 0 : index
    %0 = vector.load %arg3[%c0, %c0_0] : memref<16x128xf32, #tpu.memory_space<vmem>>, vector<16x128xf32>
    %c0_1 = arith.constant 0 : index
    %c0_2 = arith.constant 0 : index
    %1 = vector.load %arg2[%c0_1, %c0_2] : memref<16x1xf32, #tpu.memory_space<vmem>>, vector<16x1xf32>
    %2 = vector.broadcast %1 : vector<16x1xf32> to vector<16x128xf32>
    %3 = arith.subf %0, %2 : vector<16x128xf32>
    %c0_3 = arith.constant 0 : index
    %c0_4 = arith.constant 0 : index
    %4 = vector.load %arg4[%c0_3, %c0_4] : memref<16x128xf32, #tpu.memory_space<vmem>>, vector<16x128xf32>
    tpu.vector_store %arg4[%c0_3, %c0_4], %3 {strides = array<i32>} : memref<16x128xf32, #tpu.memory_space<vmem>>, vector<16x128xf32>,
    return
  }
  func.func @transform_0(%arg0: i32, %arg1: i32) -> (i32, i32) {
    %c0_i32 = arith.constant 0 : i32
    %c0_i32_0 = arith.constant 0 : i32
    return %arg0, %c0_i32 : i32, i32
  }
  func.func @transform_1(%arg0: i32, %arg1: i32) -> (i32, i32) {
    %c0_i32 = arith.constant 0 : i32
    return %arg0, %arg1 : i32, i32
  }
  func.func @transform_2(%arg0: i32, %arg1: i32) -> (i32, i32) {
    %c0_i32 = arith.constant 0 : i32
    return %arg0, %arg1 : i32, i32
  }
}

</mosaic_0001>

<llo_original>
// kernel: generator_forward_prepared.3
$region0: #{generator_forward_prepared.3}
  #allocation0 [shape = 'u32[]', space=smem, size = 0x4, offset = 0x4, fixed_abs, tag = 'smem constant byte address 0x4 - core index']
  #allocation1 [shape = 'u32[144,128]{1,0:T(1,128)}', space=vmem, size = 0x12000, scoped, tag = 'internal scratch']
  %s0 = inlined_call_operand.vmem [shape: f32[16,1], index: 0, kind: input, shape index: {}]
  %s1 = inlined_call_operand.vmem [shape: f32[16,128], index: 1, kind: input, shape index: {}]
  %s2 = inlined_call_operand.hbm [shape: f32[16,128], index: 2, kind: output, shape index: {}]
  %s3 = sld [smem:[#allocation0]]
  $region18: #{generator_forward_prepared.3} parent=0
    _
  %s5 = ssub.s32 1, %s3
  %s6 = scalar_select 0, %s5, %s3
  $region1: #{generator_forward_prepared.3} parent=0
    #allocation2 [shape = 'u8[8192]{0}', space=vmem, size = 0x2000, scoped, tag = 'output window, operand 0, single buffered']
    #allocation3 [shape = 's32[1]{0}', space=sflag, size = 0x4, scoped, tag = 'scoped memory for generator_forward_prepared.3']
    %7 = vsyncpa [#allocation3], 0
    // Predicated region
    $region2: #{generator_forward_prepared.3} parent=1 // pred_check
      _
    $region3: #{generator_forward_prepared.3} parent=1 // pred_check_branch
      %9 = sbr.rel (0) target = $region5
    $region4: #{generator_forward_prepared.3} parent=1 // pred_region
      _
    $region5: #{generator_forward_prepared.3} parent=1 // pred_fallthru
      _
    // Predicated region
    $region6: #{generator_forward_prepared.3} parent=1 // pred_check
      _
    $region7: #{generator_forward_prepared.3} parent=1 // pred_check_branch
      %11 = sbr.rel (0) target = $region9
    $region8: #{generator_forward_prepared.3} parent=1 // pred_region
      _
    $region9: #{generator_forward_prepared.3} parent=1 // pred_fallthru
      _
    %v12 = vld [vmem:[%s1] sm:$0xff]
    %v13 = vld [vmem:[%s1 + $0x8] sm:$0xff]
    %v14 = vld [vmem:[%s0] sm:$0xff]
    %v15 = vld [vmem:[%s0 + $0x8] sm:$0xff]
    %17 = vset.pattern.permute.xlu0 0
    %18 = vperm.xlu0 %17, %v14
    %v19 = vpop.permute.xlu0 %18
    %22 = vset.pattern.permute.xlu0 0
    %23 = vperm.xlu0 %22, %v15
    %v24 = vpop.permute.xlu0 %23
    %v26 = vsub.f32 %v12, %v19
    %v27 = vsub.f32 %v13, %v24
    %28 = vst [vmem:[#allocation2] sm:$0xff] %v26
    %29 = vst [vmem:[#allocation2 + $0x8] sm:$0xff] %v27
    // Predicated region
    $region10: #{generator_forward_prepared.3} parent=1 // pred_check
      _
    $region11: #{generator_forward_prepared.3} parent=1 // pred_check_branch
      %31 = sbr.rel (0) target = $region13
    $region12: #{generator_forward_prepared.3} parent=1 // pred_region
      %s33 = ssub.s32 256, 256
      %34 = vsyncadd [#allocation3], %s33
      %s35 = sshll.u32 [#allocation2], 4
      %s36 = int_to_ptr.vmem [resolvable:$true] %s35
      %41 = dma.vmem_to_hbm [thread:$0]  %s36, 256, %s2, [#allocation3], 128, 128, 8
    $region13: #{generator_forward_prepared.3} parent=1 // pred_fallthru
      _
    // Predicated region
    $region14: #{generator_forward_prepared.3} parent=1 // pred_check
      _
    $region15: #{generator_forward_prepared.3} parent=1 // pred_check_branch
      %43 = sbr.rel (0) target = $region17
    $region16: #{generator_forward_prepared.3} parent=1 // pred_region
      %44 = dma.done [#allocation3], 256
    $region17: #{generator_forward_prepared.3} parent=1 // pred_fallthru
      _
    %45 = vsyncpa [#allocation3], 1

// kernel: generator_forward_prepared.2
$region0: #{generator_forward_prepared.2}
  #allocation0 [shape = 'u32[]', space=smem, size = 0x4, offset = 0x4, fixed_abs, tag = 'smem constant byte address 0x4 - core index']
  #allocation1 [shape = 'u32[144,128]{1,0:T(1,128)}', space=vmem, size = 0x12000, scoped, tag = 'internal scratch']
  #allocation2 [shape = 'f32[16,1]{1,0:T(8,128)}', space=vmem, size = 0x2000, scoped, tag = 'scratch operand']
  #allocation3 [shape = 'f32[16,1]{1,0:T(8,128)}', space=vmem, size = 0x2000, scoped, tag = 'scratch operand']
  %s0 = inlined_call_operand.vmem [shape: f32[16,128], index: 0, kind: input, shape index: {}]
  %s1 = inlined_call_operand.hbm [shape: bf16[128,128], index: 1, kind: input, shape index: {}]
  %s2 = inlined_call_operand.vmem [shape: f32[1,128], index: 2, kind: input, shape index: {}]
  %s3 = inlined_call_operand.vmem [shape: f32[16,128], index: 3, kind: output, shape index: {0}]
  %s4 = inlined_call_operand.vmem [shape: f32[16,1], index: 4, kind: output, shape index: {1}]
  %5 = xla_tuple %s3, %s4
  %s6 = sld [smem:[#allocation0]]
  $region42: #{generator_forward_prepared.2} parent=0
    _
  %s8 = ssub.s32 1, %s6
  %s9 = scalar_select 0, %s8, %s6
  $region1: #{generator_forward_prepared.2} parent=0
    #allocation4 [shape = 'u8[32768]{0}', space=vmem, size = 0x8000, scoped, tag = 'input window, operand 1, single buffered']
    #allocation5 [shape = 's32[1]{0}', space=sflag, size = 0x4, scoped, tag = 'scoped memory for generator_forward_prepared.2']
    %10 = vsyncpa [#allocation5], 0
    // Predicated region
    $region2: #{generator_forward_prepared.2} parent=1 // pred_check
      _
    $region3: #{generator_forward_prepared.2} parent=1 // pred_check_branch
      %12 = sbr.rel (0) target = $region5
    $region4: #{generator_forward_prepared.2} parent=1 // pred_region
      _
    $region5: #{generator_forward_prepared.2} parent=1 // pred_fallthru
      _
    // Predicated region
    $region6: #{generator_forward_prepared.2} parent=1 // pred_check
      _
    $region7: #{generator_forward_prepared.2} parent=1 // pred_check_branch
      %14 = sbr.rel (0) target = $region9
    $region8: #{generator_forward_prepared.2} parent=1 // pred_region
      %s16 = ssub.s32 1024, 1024
      %17 = vsyncadd [#allocation5], %s16
      %s18 = sshll.u32 [#allocation4], 4
      %s19 = int_to_ptr.vmem [resolvable:$true] %s18
      %24 = dma.hbm_to_vmem [thread:$0]  %s1, 1024, %s19, [#allocation5], 64, 64, 4
    $region9: #{generator_forward_prepared.2} parent=1 // pred_fallthru
      _
    // Predicated region
    $region10: #{generator_forward_prepared.2} parent=1 // pred_check
      _
    $region11: #{generator_forward_prepared.2} parent=1 // pred_check_branch
      %26 = sbr.rel (0) target = $region13
    $region12: #{generator_forward_prepared.2} parent=1 // pred_region
      _
    $region13: #{generator_forward_prepared.2} parent=1 // pred_fallthru
      _
    // Predicated region
    $region14: #{generator_forward_prepared.2} parent=1 // pred_check
      _
    $region15: #{generator_forward_prepared.2} parent=1 // pred_check_branch
      %28 = sbr.rel (0) target = $region17
    $region16: #{generator_forward_prepared.2} parent=1 // pred_region
      %29 = dma.done [#allocation5], 1024
    $region17: #{generator_forward_prepared.2} parent=1 // pred_fallthru
      _
    %v31 = vld [vmem:[%s0] sm:$0xff]
    %v32 = vld [vmem:[%s0 + $0x8] sm:$0xff]
    %v33 = vpack.c.bf16 %v32, %v31
    %v34 = vld [vmem:[#allocation4] sm:$0xf]
    %v35 = vld [vmem:[#allocation4 + $0x4] sm:$0xf]
    %v36 = vld [vmem:[#allocation4 + $0x8] sm:$0xf]
    %v37 = vld [vmem:[#allocation4 + $0xc] sm:$0xf]
    %v38 = vld [vmem:[#allocation4 + $0x10] sm:$0xf]
    %v39 = vld [vmem:[#allocation4 + $0x14] sm:$0xf]
    %v40 = vld [vmem:[#allocation4 + $0x18] sm:$0xf]
    %v41 = vld [vmem:[#allocation4 + $0x1c] sm:$0xf]
    %v42 = vld [vmem:[#allocation4 + $0x20] sm:$0xf]
    %v43 = vld [vmem:[#allocation4 + $0x24] sm:$0xf]
    %v44 = vld [vmem:[#allocation4 + $0x28] sm:$0xf]
    %v45 = vld [vmem:[#allocation4 + $0x2c] sm:$0xf]
    %v46 = vld [vmem:[#allocation4 + $0x30] sm:$0xf]
    %v47 = vld [vmem:[#allocation4 + $0x34] sm:$0xf]
    %v48 = vld [vmem:[#allocation4 + $0x38] sm:$0xf]
    %v49 = vld [vmem:[#allocation4 + $0x3c] sm:$0xf]
    %v50 = vld [vmem:[%s2] sm:$0x1]
    %v52 = vlaneseq
    %v53 = vshrl.u32 %v52, 7
    %v54 = vsub.s32 0, %v53
    %v55 = vrot.slane %v50, %v54
    %v73 = vunpack.c.l.b16 %v34
    %v74 = vunpack.c.l.b16 %v35
    %v75 = vunpack.c.l.b16 %v36
    %v76 = vunpack.c.l.b16 %v37
    %v77 = vunpack.c.l.b16 %v38
    %v78 = vunpack.c.l.b16 %v39
    %v79 = vunpack.c.l.b16 %v40
    %v80 = vunpack.c.l.b16 %v41
    %v81 = vunpack.c.l.b16 %v42
    %v82 = vunpack.c.l.b16 %v43
    %v83 = vunpack.c.l.b16 %v44
    %v84 = vunpack.c.l.b16 %v45
    %v85 = vunpack.c.l.b16 %v46
    %v86 = vunpack.c.l.b16 %v47
    %v87 = vunpack.c.l.b16 %v48
    %v88 = vunpack.c.l.b16 %v49
    %v89 = vpack.c.b16 %v74, %v73
    %v90 = vpack.c.b16 %v76, %v75
    %v91 = vpack.c.b16 %v78, %v77
    %v92 = vpack.c.b16 %v80, %v79
    %v93 = vpack.c.b16 %v82, %v81
    %v94 = vpack.c.b16 %v84, %v83
    %v95 = vpack.c.b16 %v86, %v85
    %v96 = vpack.c.b16 %v88, %v87
    %105 = vmatprep.subr.bf16.mxu0 0
    %106 = vmatpush1.bf16.msra.mxu0 %v96
    %107 = vmatprep.subr.bf16.mxu0 0
    %108 = vmatpush1.bf16.msra.mxu0 %v95
    %109 = vmatprep.subr.bf16.mxu0 0
    %110 = vmatpush1.bf16.msra.mxu0 %v94
    %111 = vmatprep.subr.bf16.mxu0 0
    %112 = vmatpush1.bf16.msra.mxu0 %v93
    %113 = vmatprep.subr.bf16.mxu0 0
    %114 = vmatpush1.bf16.msra.mxu0 %v92
    %115 = vmatprep.subr.bf16.mxu0 0
    %116 = vmatpush1.bf16.msra.mxu0 %v91
    %117 = vmatprep.subr.bf16.mxu0 0
    %118 = vmatpush1.bf16.msra.mxu0 %v90
    %119 = vmatprep.subr.bf16.mxu0 0
    %120 = vmatpush1.bf16.msra.mxu0 %v89
    %121 = vmatprep.subr.bf16.mxu0 0
    %122 = vmatpush2.bf16.msra.mxu0 0
    %123 = vmatprep.subr.bf16.mxu0 0
    %124 = vmatpush2.bf16.msra.mxu0 0
    %125 = vmatprep.subr.bf16.mxu0 0
    %126 = vmatpush2.bf16.msra.mxu0 0
    %127 = vmatprep.subr.bf16.mxu0 0
    %128 = vmatpush2.bf16.msra.mxu0 0
    %129 = vmatprep.subr.bf16.mxu0 0
    %130 = vmatpush2.bf16.msra.mxu0 0
    %131 = vmatprep.subr.bf16.mxu0 0
    %132 = vmatpush2.bf16.msra.mxu0 0
    %133 = vmatprep.subr.bf16.mxu0 0
    %134 = vmatpush2.bf16.msra.mxu0 0
    %135 = vmatprep.subr.bf16.mxu0 0
    %136 = vmatpush2.bf16.msra.mxu0 0
    %137 = vmatprep.mubr.bf16.mxu0 0
    %138 = vmatmul.mubr.bf16.gmra.mxu0 %v33
    %v139 = vpop.f32.mrf.mxu0
    %v140 = vadd.f32 %v55, %v139
    %v141 = vpop.f32.mrf.mxu0
    %v142 = vpop.f32.mrf.mxu0
    %v143 = vadd.f32 %v55, %v142
    %v144 = vpop.f32.mrf.mxu0
    %145 = vdwg.mxu0
    %146 = vst [vmem:[%s3] sm:$0xff] %v140
    %147 = vst [vmem:[%s3 + $0x8] sm:$0xff] %v143
    %p148 = scmp.eq.s32.totalorder 0, 0
    // Predicated region
    $region18: #{generator_forward_prepared.2} parent=1 // pred_check
      %p149 = pneg %p148
    $region19: #{generator_forward_prepared.2} parent=1 // pred_check_branch
      %151 = sbr.rel (%p149) target = $region21
    $region20: #{generator_forward_prepared.2} parent=1 // pred_region
      %vm152 = vcmask 7168
      %153 = vst.msk [vmem:[#allocation2] sm:$0xff] %vm152, -inf
      %154 = vst.msk [vmem:[#allocation2 + $0x8] sm:$0xff] %vm152, -inf
      %155 = vst.msk [vmem:[#allocation3] sm:$0xff] %vm152, 0.0
      %156 = vst.msk [vmem:[#allocation3 + $0x8] sm:$0xff] %vm152, 0.0
    $region21: #{generator_forward_prepared.2} parent=1 // pred_fallthru
      _
    %v157 = vld [vmem:[#allocation2] sm:$0xff]
    %v158 = vld [vmem:[#allocation2 + $0x8] sm:$0xff]
    %159 = vmax.xlane.f32.xlu0 %v140
    %v160 = vpop.xlane.xlu0 %159
    %161 = vmax.xlane.f32.xlu0 %v143
    %v162 = vpop.xlane.xlu0 %161
    %v163 = vmax.f32 %v157, %v160
    %v164 = vmax.f32 %v158, %v162
    %v165 = vld [vmem:[#allocation3] sm:$0xff]
    %v166 = vld [vmem:[#allocation3 + $0x8] sm:$0xff]
    %v167 = vsub.f32 %v157, %v163
    %v168 = vsub.f32 %v158, %v164
    %v169 = vmul.f32 %v167, 1.442695
    %v170 = vpow.pop %v169
    %v171 = vmul.f32 %v168, 1.442695
    %v172 = vpow.pop %v171
    %v173 = vmul.f32 %v165, %v170
    %v174 = vmul.f32 %v166, %v172
    %176 = vset.pattern.permute.xlu0 0
    %177 = vperm.xlu0 %176, %v163
    %v178 = vpop.permute.xlu0 %177
    %181 = vset.pattern.permute.xlu0 0
    %182 = vperm.xlu0 %181, %v164
    %v183 = vpop.permute.xlu0 %182
    %v185 = vsub.f32 %v140, %v178
    %v186 = vsub.f32 %v143, %v183
    %v187 = vmul.f32 %v185, 1.442695
    %v188 = vpow.pop %v187
    %v189 = vmul.f32 %v186, 1.442695
    %v190 = vpow.pop %v189
    %191 = vadd.xlane.f32.xlu0 %v188
    %v192 = vpop.xlane.xlu0 %191
    %193 = vadd.xlane.f32.xlu0 %v190
    %v194 = vpop.xlane.xlu0 %193
    %v195 = vadd.f32 %v173, %v192
    %v196 = vadd.f32 %v174, %v194
    %vm197 = vcmask 7168
    %198 = vst.msk [vmem:[#allocation3] sm:$0xff] %vm197, %v195
    %199 = vst.msk [vmem:[#allocation3 + $0x8] sm:$0xff] %vm197, %v196
    %200 = vst.msk [vmem:[#allocation2] sm:$0xff] %vm197, %v163
    %201 = vst.msk [vmem:[#allocation2 + $0x8] sm:$0xff] %vm197, %v164
    // Predicated region
    $region22: #{generator_forward_prepared.2} parent=1 // pred_check
      %p202 = pneg %p148
    $region23: #{generator_forward_prepared.2} parent=1 // pred_check_branch
      %204 = sbr.rel (%p202) target = $region25
    $region24: #{generator_forward_prepared.2} parent=1 // pred_region
      %v205 = vld [vmem:[#allocation2] sm:$0xff]
      %v206 = vld [vmem:[#allocation2 + $0x8] sm:$0xff]
      %v207 = vld [vmem:[#allocation3] sm:$0xff]
      %v208 = vld [vmem:[#allocation3 + $0x8] sm:$0xff]
      %v209 = vlog2.pop %v207
      %v210 = vmul.f32 %v209, 0.6931472
      %v211 = vlog2.pop %v208
      %v212 = vmul.f32 %v211, 0.6931472
      %v213 = vadd.f32 %v205, %v210
      %v214 = vadd.f32 %v206, %v212
      %215 = vst.msk [vmem:[%s4] sm:$0xff] %vm197, %v213
      %216 = vst.msk [vmem:[%s4 + $0x8] sm:$0xff] %vm197, %v214
    $region25: #{generator_forward_prepared.2} parent=1 // pred_fallthru
      _
    // Predicated region
    $region26: #{generator_forward_prepared.2} parent=1 // pred_check
      _
    $region27: #{generator_forward_prepared.2} parent=1 // pred_check_branch
      %218 = sbr.rel (0) target = $region29
    $region28: #{generator_forward_prepared.2} parent=1 // pred_region
      _
    $region29: #{generator_forward_prepared.2} parent=1 // pred_fallthru
      _
    // Predicated region
    $region30: #{generator_forward_prepared.2} parent=1 // pred_check
      _
    $region31: #{generator_forward_prepared.2} parent=1 // pred_check_branch
      %220 = sbr.rel (0) target = $region33
    $region32: #{generator_forward_prepared.2} parent=1 // pred_region
      _
    $region33: #{generator_forward_prepared.2} parent=1 // pred_fallthru
      _
    // Predicated region
    $region34: #{generator_forward_prepared.2} parent=1 // pred_check
      _
    $region35: #{generator_forward_prepared.2} parent=1 // pred_check_branch
      %222 = sbr.rel (0) target = $region37
    $region36: #{generator_forward_prepared.2} parent=1 // pred_region
      _
    $region37: #{generator_forward_prepared.2} parent=1 // pred_fallthru
      _
    // Predicated region
    $region38: #{generator_forward_prepared.2} parent=1 // pred_check
      _
    $region39: #{generator_forward_prepared.2} parent=1 // pred_check_branch
      %224 = sbr.rel (0) target = $region41
    $region40: #{generator_forward_prepared.2} parent=1 // pred_region
      _
    $region41: #{generator_forward_prepared.2} parent=1 // pred_fallthru
      _
    %225 = vsyncpa [#allocation5], 1

</llo_original>
